<compile_context>
chip_gen: v6e
topology: v6e:2x2x1
jax: 0.10.0
libtpu: 0.0.40
codegen_flags: <defaults>
</compile_context>

<pallas_src>
import functools

import jax
import jax.numpy as jnp
from jax.experimental import pallas as pl
from jax.experimental.pallas import tpu as pltpu


# ---------------------------------------------------------------------------
# Kernels
# ---------------------------------------------------------------------------
def _unembed_kernel_kacc(x_ref, w_ref, b_ref, o_ref, acc_ref):
    """3-D grid (i, j, k): accumulate over the d_model (K) axis in f32."""
    k = pl.program_id(2)

    @pl.when(k == 0)
    def _():
        acc_ref[...] = jnp.zeros_like(acc_ref)

    acc_ref[...] += jnp.dot(
        x_ref[...], w_ref[...], preferred_element_type=jnp.float32
    )

    @pl.when(k == pl.num_programs(2) - 1)
    def _():
        o_ref[...] = (acc_ref[...] + b_ref[...].astype(jnp.float32)).astype(
            o_ref.dtype
        )


def _unembed_kernel_fullk(x_ref, w_ref, b_ref, o_ref):
    """2-D grid (i, j): the whole d_model fits one block -> no accumulator."""
    o_ref[...] = (
        jnp.dot(x_ref[...], w_ref[...], preferred_element_type=jnp.float32)
        + b_ref[...].astype(jnp.float32)
    ).astype(o_ref.dtype)


# ---------------------------------------------------------------------------
# Helpers
# ---------------------------------------------------------------------------
def _ceil_to(x: int, m: int) -> int:
    return ((x + m - 1) // m) * m


def _pick_tile(extent: int, preferred: int, unit: int):
    """Largest `unit`-aligned tile <= `preferred` that divides the
    unit-aligned extent.  Minimizes padding (avoids a logits-sized slice-copy
    on the output) while keeping tiles as large as possible."""
    padded = _ceil_to(max(extent, 1), unit)
    limit = min(_ceil_to(max(preferred, unit), unit), padded)
    best = unit
    t = unit
    while t <= limit:
        if padded % t == 0:
            best = t
        t += unit
    return best, padded


def _vmem_need(tm, tk, tn, num_k, x_it, w_it, b_it, o_it, w_bufs):
    """Rough VMEM working-set estimate (double-buffered pipeline)."""
    need = 2 * tm * tk * x_it          # x blocks (double buffered)
    need += w_bufs * tk * tn * w_it    # W_U blocks
    need += 2 * tn * b_it              # bias blocks (tiny)
    need += 2 * tm * tn * o_it         # output blocks
    if num_k > 1:
        need += tm * tn * 4            # f32 accumulator scratch
    return need


def _w_blockspec(shape, index_map, bufs):
    """W_U BlockSpec, optionally with 3-deep buffering for decode regime."""
    if bufs > 2:
        try:
            return pl.BlockSpec(shape, index_map, pipeline_mode=pl.Buffered(bufs))
        except TypeError:  # fall back gracefully if pipeline_mode unsupported
            pass
    return pl.BlockSpec(shape, index_map)


# ---------------------------------------------------------------------------
# Public entry point
# ---------------------------------------------------------------------------
@functools.partial(jax.jit, static_argnames=("tm", "tn", "tk"))
def unembed(
    normalized_resid_final: jax.Array,
    W_U: jax.Array,
    b_U: jax.Array,
    *,
    tm: int = 512,
    tn: int = 1024,
    tk: int = 512,
) -> jax.Array:
    """Pallas equivalent of Unembed.forward: resid @ W_U + b_U."""
    B, P, D = normalized_resid_final.shape
    Dw, V = W_U.shape
    assert D == Dw, "d_model mismatch between resid and W_U"
    assert b_U.shape == (V,), "b_U must have shape (d_vocab,)"
    M = B * P

    x_it = jnp.dtype(normalized_resid_final.dtype).itemsize
    w_it = jnp.dtype(W_U.dtype).itemsize
    b_it = jnp.dtype(b_U.dtype).itemsize
    out_dtype = jnp.result_type(
        normalized_resid_final.dtype, W_U.dtype, b_U.dtype
    )
    o_it = jnp.dtype(out_dtype).itemsize

    # --- tile selection (divisor tiles -> no padding in the common case) ---
    tm, Mp = _pick_tile(M, tm, 8)
    tn, Np = _pick_tile(V, tn, 128)
    tk, Kp = _pick_tile(D, tk, 128)

    num_i = Mp // tm
    num_j = Np // tn

    # Collapse the K grid axis (drop accumulator) when full-K blocks fit.
    VMEM_BUDGET = 40 << 20  # per-TensorCore cap, safe on v7x's 64 MiB
    w_bufs_c = 3 if (num_i == 1 and num_j >= 3) else 2
    if _vmem_need(tm, Kp, tn, 1, x_it, w_it, b_it, o_it, w_bufs_c) <= VMEM_BUDGET:
        tk = Kp
    num_k = Kp // tk

    # Decode / small-M regime: deeper buffering on the streamed weight.
    w_bufs = 3 if (num_i == 1 and num_j * num_k >= 3) else 2
    vmem_need = _vmem_need(tm, tk, tn, num_k, x_it, w_it, b_it, o_it, w_bufs)
    vmem_limit = int(min(max(vmem_need + (8 << 20), 32 << 20), 64 << 20))

    # --- operand prep (native dtypes; padding only in the uncommon case) ---
    x = normalized_resid_final.reshape(M, D)
    if (Mp, Kp) != (M, D):
        x = jnp.pad(x, ((0, Mp - M), (0, Kp - D)))
    # TODO(synk): in a real model, pre-pad W_U once at init (only hit when
    # d_model / d_vocab are not 128-multiples) instead of per call.
    w = W_U
    if (Kp, Np) != (D, V):
        w = jnp.pad(W_U, ((0, Kp - D), (0, Np - V)))
    b2 = b_U.reshape(1, V)
    if Np != V:
        b2 = jnp.pad(b2, ((0, 0), (0, Np - V)))

    # Cost estimate including block revisits (x re-read per j, W per i).
    cost = pl.CostEstimate(
        flops=2 * Mp * Kp * Np,
        transcendentals=0,
        bytes_accessed=(
            num_j * Mp * Kp * x_it
            + num_i * Kp * Np * w_it
            + Np * b_it
            + Mp * Np * o_it
        ),
    )

    if num_k == 1:
        grid = (num_i, num_j)
        in_specs = [
            pl.BlockSpec((tm, Kp), lambda i, j: (i, 0)),      # resid block
            _w_blockspec((Kp, tn), lambda i, j: (0, j), w_bufs),  # W_U block
            pl.BlockSpec((1, tn), lambda i, j: (0, j)),       # b_U block
        ]
        out_spec = pl.BlockSpec((tm, tn), lambda i, j: (i, j))
        scratch = []
        kernel = _unembed_kernel_fullk
        semantics = ("parallel", "parallel")
    else:
        grid = (num_i, num_j, num_k)
        in_specs = [
            pl.BlockSpec((tm, tk), lambda i, j, k: (i, k)),
            _w_blockspec((tk, tn), lambda i, j, k: (k, j), w_bufs),
            pl.BlockSpec((1, tn), lambda i, j, k: (0, j)),
        ]
        out_spec = pl.BlockSpec((tm, tn), lambda i, j, k: (i, j))
        scratch = [pltpu.VMEM((tm, tn), jnp.float32)]
        kernel = _unembed_kernel_kacc
        semantics = ("parallel", "parallel", "arbitrary")

    out = pl.pallas_call(
        kernel,
        out_shape=jax.ShapeDtypeStruct((Mp, Np), out_dtype),
        grid_spec=pltpu.PrefetchScalarGridSpec(
            num_scalar_prefetch=0,
            grid=grid,
            in_specs=in_specs,
            out_specs=out_spec,
            scratch_shapes=scratch,
        ),
        compiler_params=pltpu.CompilerParams(
            dimension_semantics=semantics,
            vmem_limit_bytes=vmem_limit,
        ),
        cost_estimate=cost,
    )(x, w, b2)

    if (Mp, Np) != (M, V):
        out = out[:M, :V]
    return out.reshape(B, P, V)


# ---------------------------------------------------------------------------
# Self-test
# ---------------------------------------------------------------------------
if __name__ == "__main__":
    # Small synthetic config consistent with the Transformer Config.
    d_model = 128
    d_vocab = 256
    init_range = 0.02
    batch, position = 2, 8

    key = jax.random.PRNGKey(0)
    k_w, k_x = jax.random.split(key)

    # nn.init.normal_(std=init_range) analogue; b_U zeros as in the module.
    W_U = init_range * jax.random.normal(k_w, (d_model, d_vocab), dtype=jnp.float32)
    b_U = jnp.zeros((d_vocab,), dtype=jnp.float32)
    resid = jax.random.normal(k_x, (batch, position, d_model), dtype=jnp.float32)

    out = unembed(resid, W_U, b_U)
    out = jax.block_until_ready(out)

    # Reference: resid @ W_U + b_U in plain JAX at highest precision.
    ref = (
        jnp.einsum(
            "bpd,dv->bpv", resid, W_U, precision=jax.lax.Precision.HIGHEST
        )
        + b_U
    )

    assert out.shape == (batch, position, d_vocab)
    assert out.dtype == jnp.float32
    assert jnp.allclose(out, ref, rtol=1e-3, atol=1e-3), (
        "Pallas unembed mismatch vs reference matmul"
    )

    print("KERNEL_OK")
</pallas_src>

<mosaic_0001>
module attributes {stable_mosaic.version = 11 : i64} {
  func.func @_unembed_kernel_fullk(%arg0: i32, %arg1: i32, %arg2: memref<16x128xf32, #tpu.memory_space<vmem>>, %arg3: memref<128x256xf32, #tpu.memory_space<vmem>>, %arg4: memref<1x256xf32, #tpu.memory_space<vmem>>, %arg5: memref<16x256xf32, #tpu.memory_space<vmem>>) attributes {dimension_semantics = [#tpu.dimension_semantics<parallel>, #tpu.dimension_semantics<parallel>], iteration_bounds = array<i64: 1, 1>, scalar_prefetch = 0 : i64, scratch_operands = 0 : i64, tpu.core_type = #tpu.core_type<tc>, window_params = [{transform_indices = @transform_0, window_bounds = array<i64: 16, 128>}, {transform_indices = @transform_1, window_bounds = array<i64: 128, 256>}, {transform_indices = @transform_2, window_bounds = array<i64: 1, 256>}, {transform_indices = @transform_3, window_bounds = array<i64: 16, 256>}]} {
    %c0 = arith.constant 0 : index
    %c0_0 = arith.constant 0 : index
    %0 = vector.load %arg2[%c0, %c0_0] : memref<16x128xf32, #tpu.memory_space<vmem>>, vector<16x128xf32>
    %c0_1 = arith.constant 0 : index
    %c0_2 = arith.constant 0 : index
    %1 = vector.load %arg3[%c0_1, %c0_2] : memref<128x256xf32, #tpu.memory_space<vmem>>, vector<128x256xf32>
    %cst = arith.constant dense<0.000000e+00> : vector<16x256xf32>
    %2 = tpu.matmul %0, %1, %cst {dimension_numbers = #tpu.dot_dimension_numbers<[1], [0], [0], [1], [0, 0, 1, 1], [], []>} : vector<16x128xf32>, vector<128x256xf32>, vector<16x256xf32> -> vector<16x256xf32>
    %c0_3 = arith.constant 0 : index
    %c0_4 = arith.constant 0 : index
    %3 = vector.load %arg4[%c0_3, %c0_4] : memref<1x256xf32, #tpu.memory_space<vmem>>, vector<1x256xf32>
    %4 = vector.broadcast %3 : vector<1x256xf32> to vector<16x256xf32>
    %5 = arith.addf %2, %4 : vector<16x256xf32>
    %c0_5 = arith.constant 0 : index
    %c0_6 = arith.constant 0 : index
    %6 = vector.load %arg5[%c0_5, %c0_6] : memref<16x256xf32, #tpu.memory_space<vmem>>, vector<16x256xf32>
    tpu.vector_store %arg5[%c0_5, %c0_6], %5 {strides = array<i32>} : memref<16x256xf32, #tpu.memory_space<vmem>>, vector<16x256xf32>,
    return
  }
  func.func @transform_0(%arg0: i32, %arg1: i32) -> (i32, i32) {
    %c0_i32 = arith.constant 0 : i32
    %c0_i32_0 = arith.constant 0 : i32
    return %arg0, %c0_i32 : i32, i32
  }
  func.func @transform_1(%arg0: i32, %arg1: i32) -> (i32, i32) {
    %c0_i32 = arith.constant 0 : i32
    %c0_i32_0 = arith.constant 0 : i32
    return %c0_i32, %arg1 : i32, i32
  }
  func.func @transform_2(%arg0: i32, %arg1: i32) -> (i32, i32) {
    %c0_i32 = arith.constant 0 : i32
    %c0_i32_0 = arith.constant 0 : i32
    return %c0_i32, %arg1 : i32, i32
  }
  func.func @transform_3(%arg0: i32, %arg1: i32) -> (i32, i32) {
    %c0_i32 = arith.constant 0 : i32
    return %arg0, %arg1 : i32, i32
  }
}

</mosaic_0001>

<llo_original>
// kernel: unembed.1
$region0: #{unembed.1}
  #allocation0 [shape = 'u32[]', space=smem, size = 0x4, offset = 0x4, fixed_abs, tag = 'smem constant byte address 0x4 - core index']
  #allocation1 [shape = 'u32[144,128]{1,0:T(1,128)}', space=vmem, size = 0x12000, scoped, tag = 'internal scratch']
  %s0 = inlined_call_operand.hbm [shape: f32[16,128], index: 0, kind: input, shape index: {}]
  %s1 = inlined_call_operand.hbm [shape: f32[128,256], index: 1, kind: input, shape index: {}]
  %s2 = inlined_call_operand.vmem [shape: f32[1,256], index: 2, kind: input, shape index: {}]
  %s3 = inlined_call_operand.hbm [shape: f32[16,256], index: 3, kind: output, shape index: {}]
  %s4 = sld [smem:[#allocation0]]
  $region30: #{unembed.1} parent=0
    _
  %s6 = ssub.s32 1, %s4
  %s7 = scalar_select 0, %s6, %s4
  $region1: #{unembed.1} parent=0
    #allocation2 [shape = 'u8[8192]{0}', space=vmem, size = 0x2000, scoped, tag = 'input window, operand 0, single buffered']
    #allocation3 [shape = 's32[1]{0}', space=sflag, size = 0x4, scoped, tag = 'scoped memory for unembed.1']
    #allocation4 [shape = 's32[1]{0}', space=sflag, size = 0x4, scoped, tag = 'scoped memory for unembed.1']
    #allocation5 [shape = 'u8[131072]{0}', space=vmem, size = 0x20000, scoped, tag = 'input window, operand 1, single buffered']
    #allocation6 [shape = 's32[1]{0}', space=sflag, size = 0x4, scoped, tag = 'scoped memory for unembed.1']
    #allocation7 [shape = 'u8[16384]{0}', space=vmem, size = 0x4000, scoped, tag = 'output window, operand 0, single buffered']
    %8 = vsyncpa [#allocation3], 0
    %9 = vsyncpa [#allocation6], 0
    %10 = vsyncpa [#allocation4], 0
    // Predicated region
    $region2: #{unembed.1} parent=1 // pred_check
      _
    $region3: #{unembed.1} parent=1 // pred_check_branch
      %12 = sbr.rel (0) target = $region5
    $region4: #{unembed.1} parent=1 // pred_region
      %s14 = ssub.s32 256, 256
      %15 = vsyncadd [#allocation3], %s14
      %s16 = sshll.u32 [#allocation2], 4
      %s17 = int_to_ptr.vmem [resolvable:$true] %s16
      %22 = dma.hbm_to_vmem [thread:$0]  %s0, 256, %s17, [#allocation3], 128, 128, 8
    $region5: #{unembed.1} parent=1 // pred_fallthru
      _
    // Predicated region
    $region6: #{unembed.1} parent=1 // pred_check
      _
    $region7: #{unembed.1} parent=1 // pred_check_branch
      %24 = sbr.rel (0) target = $region9
    $region8: #{unembed.1} parent=1 // pred_region
      %s26 = ssub.s32 4096, 4096
      %27 = vsyncadd [#allocation6], %s26
      %s28 = sshll.u32 [#allocation5], 4
      %s29 = int_to_ptr.vmem [resolvable:$true] %s28
      %34 = dma.hbm_to_vmem [thread:$0]  %s1, 4096, %s29, [#allocation6], 256, 256, 16
    $region9: #{unembed.1} parent=1 // pred_fallthru
      _
    // Predicated region
    $region10: #{unembed.1} parent=1 // pred_check
      _
    $region11: #{unembed.1} parent=1 // pred_check_branch
      %36 = sbr.rel (0) target = $region13
    $region12: #{unembed.1} parent=1 // pred_region
      _
    $region13: #{unembed.1} parent=1 // pred_fallthru
      _
    // Predicated region
    $region14: #{unembed.1} parent=1 // pred_check
      _
    $region15: #{unembed.1} parent=1 // pred_check_branch
      %38 = sbr.rel (0) target = $region17
    $region16: #{unembed.1} parent=1 // pred_region
      %39 = dma.done [#allocation3], 256
    $region17: #{unembed.1} parent=1 // pred_fallthru
      _
    // Predicated region
    $region18: #{unembed.1} parent=1 // pred_check
      _
    $region19: #{unembed.1} parent=1 // pred_check_branch
      %41 = sbr.rel (0) target = $region21
    $region20: #{unembed.1} parent=1 // pred_region
      %42 = dma.done [#allocation6], 4096
    $region21: #{unembed.1} parent=1 // pred_fallthru
      _
    %v43 = vld [vmem:[#allocation2] sm:$0xff]
    %v44 = vld [vmem:[#allocation2 + $0x8] sm:$0xff]
    %v45 = vld [vmem:[#allocation5] sm:$0xff]
    %v46 = vld [vmem:[#allocation5 + $0x8] sm:$0xff]
    %v47 = vld [vmem:[#allocation5 + $0x10] sm:$0xff]
    %v48 = vld [vmem:[#allocation5 + $0x18] sm:$0xff]
    %v49 = vld [vmem:[#allocation5 + $0x20] sm:$0xff]
    %v50 = vld [vmem:[#allocation5 + $0x28] sm:$0xff]
    %v51 = vld [vmem:[#allocation5 + $0x30] sm:$0xff]
    %v52 = vld [vmem:[#allocation5 + $0x38] sm:$0xff]
    %v53 = vld [vmem:[#allocation5 + $0x40] sm:$0xff]
    %v54 = vld [vmem:[#allocation5 + $0x48] sm:$0xff]
    %v55 = vld [vmem:[#allocation5 + $0x50] sm:$0xff]
    %v56 = vld [vmem:[#allocation5 + $0x58] sm:$0xff]
    %v57 = vld [vmem:[#allocation5 + $0x60] sm:$0xff]
    %v58 = vld [vmem:[#allocation5 + $0x68] sm:$0xff]
    %v59 = vld [vmem:[#allocation5 + $0x70] sm:$0xff]
    %v60 = vld [vmem:[#allocation5 + $0x78] sm:$0xff]
    %v61 = vld [vmem:[#allocation5 + $0x80] sm:$0xff]
    %v62 = vld [vmem:[#allocation5 + $0x88] sm:$0xff]
    %v63 = vld [vmem:[#allocation5 + $0x90] sm:$0xff]
    %v64 = vld [vmem:[#allocation5 + $0x98] sm:$0xff]
    %v65 = vld [vmem:[#allocation5 + $0xa0] sm:$0xff]
    %v66 = vld [vmem:[#allocation5 + $0xa8] sm:$0xff]
    %v67 = vld [vmem:[#allocation5 + $0xb0] sm:$0xff]
    %v68 = vld [vmem:[#allocation5 + $0xb8] sm:$0xff]
    %v69 = vld [vmem:[#allocation5 + $0xc0] sm:$0xff]
    %v70 = vld [vmem:[#allocation5 + $0xc8] sm:$0xff]
    %v71 = vld [vmem:[#allocation5 + $0xd0] sm:$0xff]
    %v72 = vld [vmem:[#allocation5 + $0xd8] sm:$0xff]
    %v73 = vld [vmem:[#allocation5 + $0xe0] sm:$0xff]
    %v74 = vld [vmem:[#allocation5 + $0xe8] sm:$0xff]
    %v75 = vld [vmem:[#allocation5 + $0xf0] sm:$0xff]
    %v76 = vld [vmem:[#allocation5 + $0xf8] sm:$0xff]
    %v77 = vld [vmem:[%s2] sm:$0x3]
    %v79 = vlaneseq
    %v80 = vshrl.u32 %v79, 7
    %v81 = vsub.s32 0, %v80
    %v82 = vrot.slane %v77, %v81
    %v83 = vlaneseq
    %v84 = vshrl.u32 %v83, 7
    %v85 = vsub.s32 1, %v84
    %v86 = vrot.slane %v77, %v85
    %89 = vmatprep.subr.mxu0 %v76
    %90 = vmatpush1.msra.mxu0 %v75
    %91 = vmatprep.subr.mxu0 %v74
    %92 = vmatpush1.msra.mxu0 %v73
    %93 = vmatprep.subr.mxu0 %v72
    %94 = vmatpush1.msra.mxu0 %v71
    %95 = vmatprep.subr.mxu0 %v70
    %96 = vmatpush1.msra.mxu0 %v69
    %97 = vmatprep.subr.mxu0 %v68
    %98 = vmatpush1.msra.mxu0 %v67
    %99 = vmatprep.subr.mxu0 %v66
    %100 = vmatpush1.msra.mxu0 %v65
    %101 = vmatprep.subr.mxu0 %v64
    %102 = vmatpush1.msra.mxu0 %v63
    %103 = vmatprep.subr.mxu0 %v62
    %104 = vmatpush1.msra.mxu0 %v61
    %105 = vmatprep.subr.mxu0 %v60
    %106 = vmatpush1.msra.mxu0 %v59
    %107 = vmatprep.subr.mxu0 %v58
    %108 = vmatpush1.msra.mxu0 %v57
    %109 = vmatprep.subr.mxu0 %v56
    %110 = vmatpush1.msra.mxu0 %v55
    %111 = vmatprep.subr.mxu0 %v54
    %112 = vmatpush1.msra.mxu0 %v53
    %113 = vmatprep.subr.mxu0 %v52
    %114 = vmatpush1.msra.mxu0 %v51
    %115 = vmatprep.subr.mxu0 %v50
    %116 = vmatpush1.msra.mxu0 %v49
    %117 = vmatprep.subr.mxu0 %v48
    %118 = vmatpush1.msra.mxu0 %v47
    %119 = vmatprep.subr.mxu0 %v46
    %120 = vmatpush1.msra.mxu0 %v45
    %121 = vmatprep.subr.mxu0 0.0
    %122 = vmatpush2.msra.mxu0 0.0
    %123 = vmatprep.subr.mxu0 0.0
    %124 = vmatpush2.msra.mxu0 0.0
    %125 = vmatprep.subr.mxu0 0.0
    %126 = vmatpush2.msra.mxu0 0.0
    %127 = vmatprep.subr.mxu0 0.0
    %128 = vmatpush2.msra.mxu0 0.0
    %129 = vmatprep.subr.mxu0 0.0
    %130 = vmatpush2.msra.mxu0 0.0
    %131 = vmatprep.subr.mxu0 0.0
    %132 = vmatpush2.msra.mxu0 0.0
    %133 = vmatprep.subr.mxu0 0.0
    %134 = vmatpush2.msra.mxu0 0.0
    %135 = vmatprep.subr.mxu0 0.0
    %136 = vmatpush2.msra.mxu0 0.0
    %137 = vmatprep.subr.mxu0 0.0
    %138 = vmatpush2.msra.mxu0 0.0
    %139 = vmatprep.subr.mxu0 0.0
    %140 = vmatpush2.msra.mxu0 0.0
    %141 = vmatprep.subr.mxu0 0.0
    %142 = vmatpush2.msra.mxu0 0.0
    %143 = vmatprep.subr.mxu0 0.0
    %144 = vmatpush2.msra.mxu0 0.0
    %145 = vmatprep.subr.mxu0 0.0
    %146 = vmatpush2.msra.mxu0 0.0
    %147 = vmatprep.subr.mxu0 0.0
    %148 = vmatpush2.msra.mxu0 0.0
    %149 = vmatprep.subr.mxu0 0.0
    %150 = vmatpush2.msra.mxu0 0.0
    %151 = vmatprep.subr.mxu0 0.0
    %152 = vmatpush2.msra.mxu0 0.0
    %153 = vmatprep.mubr.f32.mxu0 0.0
    %154 = vmatmul.mubr.f32.gmra.mxu0 %v43
    %v155 = vpop.f32.mrf.mxu0
    %v156 = vadd.f32 %v82, %v155
    %v157 = vpop.f32.mrf.mxu0
    %v158 = vadd.f32 %v86, %v157
    %159 = vmatprep.mubr.f32.mxu0 0.0
    %160 = vmatmul.mubr.f32.gmra.mxu0 %v44
    %v161 = vpop.f32.mrf.mxu0
    %v162 = vadd.f32 %v82, %v161
    %v163 = vpop.f32.mrf.mxu0
    %v164 = vadd.f32 %v86, %v163
    %165 = vdwg.mxu0
    %166 = vst [vmem:[#allocation7] sm:$0xff] %v156
    %167 = vst [vmem:[#allocation7 + $0x8] sm:$0xff] %v158
    %168 = vst [vmem:[#allocation7 + $0x10] sm:$0xff] %v162
    %169 = vst [vmem:[#allocation7 + $0x18] sm:$0xff] %v164
    // Predicated region
    $region22: #{unembed.1} parent=1 // pred_check
      _
    $region23: #{unembed.1} parent=1 // pred_check_branch
      %171 = sbr.rel (0) target = $region25
    $region24: #{unembed.1} parent=1 // pred_region
      %s173 = ssub.s32 512, 512
      %174 = vsyncadd [#allocation4], %s173
      %s175 = sshll.u32 [#allocation7], 4
      %s176 = int_to_ptr.vmem [resolvable:$true] %s175
      %181 = dma.vmem_to_hbm [thread:$0]  %s176, 512, %s3, [#allocation4], 256, 256, 16
    $region25: #{unembed.1} parent=1 // pred_fallthru
      _
    // Predicated region
    $region26: #{unembed.1} parent=1 // pred_check
      _
    $region27: #{unembed.1} parent=1 // pred_check_branch
      %183 = sbr.rel (0) target = $region29
    $region28: #{unembed.1} parent=1 // pred_region
      %184 = dma.done [#allocation4], 512
    $region29: #{unembed.1} parent=1 // pred_fallthru
      _
    %185 = vsyncpa [#allocation3], 1
    %186 = vsyncpa [#allocation6], 1
    %187 = vsyncpa [#allocation4], 1

</llo_original>
